<compile_context>
chip_gen: v7x
topology: tpu7x:2x2x1
jax: 0.10.0
libtpu: 0.0.40
codegen_flags: <defaults>
</compile_context>

<pallas_src>
import jax
import jax.numpy as jnp
from jax.experimental import pallas as pl
from jax.experimental.pallas import tpu as pltpu


_LANES = 128
_TARGET_BLOCK_BYTES = 2 * 1024 * 1024   # ~2 MiB per input block per grid step
_MIN_PALLAS_ELEMS = 1 << 18             # below this XLA's fused reduce wins
_NUM_TC_SPLITS = 2                      # megacore split (v7x); harmless on 1-TC chips


def _cdiv(a, b):
    return -(-a // b)


def _round_up(a, b):
    return _cdiv(a, b) * b


def _pick_tile_rows(n_elems, itemsize, block_bytes):
    """Rows per block, scaled so one block is ~block_bytes for this dtype."""
    rows_true = _cdiv(n_elems, _LANES)
    target = max(8, block_bytes // (_LANES * itemsize))
    tile = min(target, _round_up(rows_true, 8))
    return max(8, (tile // 8) * 8)


def _to_lane_rows(x, tile_rows):
    """Flatten to a lane-dense (rows, 128) slab with rows >= tile_rows.

    No copy in the common case (size % 128 == 0 and the stream spans at least
    one tile); otherwise a single bounded jnp.pad (zeros are sum-neutral).
    """
    flat = x.reshape(-1)
    n = flat.shape[0]
    rows = max(_cdiv(n, _LANES), tile_rows)
    total = rows * _LANES
    if total != n:
        # TODO(synk): sizes that are not a multiple of 128 pay one pad copy; a
        # scalar-path tail would avoid it but is not worth it for a loss scalar.
        flat = jnp.pad(flat, (0, total - n))
    return flat.reshape(rows, _LANES)


def _make_kernel(streams, inner_blocks):
    """streams: ((rows_real, tile_real), (rows_fake, tile_fake))."""

    def kernel(real_ref, fake_ref, out_real_ref, out_fake_ref):
        o = pl.program_id(0)           # megacore split axis ("parallel")
        i = pl.program_id(1)           # reduction axis ("arbitrary")
        blk = o * inner_blocks + i     # global row-block index

        @pl.when(i == 0)
        def _init():
            out_real_ref[...] = jnp.zeros_like(out_real_ref)
            out_fake_ref[...] = jnp.zeros_like(out_fake_ref)

        def accumulate(x_ref, out_ref, rows_arr, tile_rows):
            groups = tile_rows // 8
            full_blocks = rows_arr // tile_rows      # blocks with every row valid
            num_blocks = _cdiv(rows_arr, tile_rows)  # blocks with any valid row

            def fold(x):
                # (tile_rows,128) -> (groups,8,128), sum over leading axis:
                # pure vreg-to-vreg VPU adds, no per-step XLU traffic.
                return jnp.sum(x.reshape(groups, 8, _LANES), axis=0)[None, :, :]

            @pl.when(blk < full_blocks)
            def _full():                             # steady state: no masking
                out_ref[...] += fold(x_ref[...].astype(jnp.float32))

            @pl.when(jnp.logical_and(blk >= full_blocks, blk < num_blocks))
            def _tail():                             # ragged boundary block
                rid = blk * tile_rows + jax.lax.broadcasted_iota(
                    jnp.int32, (tile_rows, _LANES), 0)
                x = x_ref[...].astype(jnp.float32)
                out_ref[...] += fold(jnp.where(rid < rows_arr, x, 0.0))
            # blk >= num_blocks: this stream is finished; its index_map clamps
            # to the last valid block so the DMA is skipped and nothing is added.

        (rows_r, tile_r), (rows_f, tile_f) = streams
        accumulate(real_ref, out_real_ref, rows_r, tile_r)
        accumulate(fake_ref, out_fake_ref, rows_f, tile_f)

    return kernel


def _reference(D_real, D_fake):
    """Pure-JAX reference mirroring the PyTorch module."""
    r = D_real.astype(jnp.float32)
    f = D_fake.astype(jnp.float32)
    return -(jnp.mean(r) - jnp.mean(f))


def wasserstein_d_loss(D_real, D_fake, *, force_pallas=False,
                       block_bytes=_TARGET_BLOCK_BYTES):
    """Scalar Wasserstein discriminator loss: mean(D_fake) - mean(D_real)."""
    n_real = int(D_real.size)
    n_fake = int(D_fake.size)

    if not force_pallas and (n_real + n_fake) < _MIN_PALLAS_ELEMS:
        # Small inputs: launch/prologue cost dominates; XLA's fused reduce wins.
        return _reference(D_real, D_fake)

    # Per-stream, dtype-scaled block rows (~block_bytes per block per stream).
    tile_real = _pick_tile_rows(n_real, D_real.dtype.itemsize, block_bytes)
    tile_fake = _pick_tile_rows(n_fake, D_fake.dtype.itemsize, block_bytes)

    real2d = _to_lane_rows(D_real, tile_real)
    fake2d = _to_lane_rows(D_fake, tile_fake)
    rows_real, rows_fake = real2d.shape[0], fake2d.shape[0]

    nblk_real = _cdiv(rows_real, tile_real)
    nblk_fake = _cdiv(rows_fake, tile_fake)
    total_blocks = max(nblk_real, nblk_fake)

    # Megacore split: only worth >1 when there is more than one block.
    num_splits = _NUM_TC_SPLITS if total_blocks >= _NUM_TC_SPLITS else 1
    inner_blocks = _cdiv(total_blocks, num_splits)
    grid = (num_splits, inner_blocks)

    def in_map(nblk):
        last = nblk - 1
        # Clamp to the stream's last valid block: repeated block index => the
        # pipeline skips the re-DMA, so the short stream adds no HBM traffic.
        return lambda o, i: (jnp.minimum(o * inner_blocks + i, last), 0)

    kernel = _make_kernel(((rows_real, tile_real), (rows_fake, tile_fake)),
                          inner_blocks)

    out_real, out_fake = pl.pallas_call(
        kernel,
        out_shape=(
            jax.ShapeDtypeStruct((num_splits, 8, _LANES), jnp.float32),
            jax.ShapeDtypeStruct((num_splits, 8, _LANES), jnp.float32),
        ),
        grid_spec=pltpu.PrefetchScalarGridSpec(
            num_scalar_prefetch=0,
            grid=grid,
            in_specs=[
                pl.BlockSpec((tile_real, _LANES), in_map(nblk_real)),
                pl.BlockSpec((tile_fake, _LANES), in_map(nblk_fake)),
            ],
            out_specs=(
                pl.BlockSpec((1, 8, _LANES), lambda o, i: (o, 0, 0)),
                pl.BlockSpec((1, 8, _LANES), lambda o, i: (o, 0, 0)),
            ),
        ),
        compiler_params=pltpu.CompilerParams(
            dimension_semantics=("parallel", "arbitrary")),
    )(real2d, fake2d)

    # Tiny final combine (2x8x128 floats per stream) fuses into the caller's
    # graph; the means divide by the true element counts (padding is sum-neutral).
    mean_real = jnp.sum(out_real) / n_real
    mean_fake = jnp.sum(out_fake) / n_fake
    return mean_fake - mean_real


if __name__ == "__main__":
    key = jax.random.PRNGKey(0)
    k1, k2, k3, k4, k5, k6 = jax.random.split(key, 6)

    # 1) Small critic-output shape (PatchGAN-style score map), NCHW, f32.
    shape = (2, 1, 16, 16)
    D_real = jax.random.normal(k1, shape, dtype=jnp.float32)
    D_fake = jax.random.normal(k2, shape, dtype=jnp.float32)
    d_loss = wasserstein_d_loss(D_real, D_fake, force_pallas=True)
    jax.block_until_ready(d_loss)
    assert jnp.allclose(d_loss, _reference(D_real, D_fake), rtol=1e-5, atol=1e-5)

    # 2) Mismatched sizes, bf16 inputs, per-stream block rows.
    Dr2 = jax.random.normal(k3, (2, 4, 96, 128), dtype=jnp.bfloat16)
    Df2 = jax.random.normal(k4, (2, 4, 64, 64), dtype=jnp.bfloat16)
    d_loss2 = wasserstein_d_loss(Dr2, Df2, force_pallas=True)
    jax.block_until_ready(d_loss2)
    assert jnp.allclose(d_loss2, _reference(Dr2, Df2), rtol=1e-3, atol=1e-3)

    # 3) Force a multi-block grid with the megacore split, stream clamping and
    #    ragged-tail masking by shrinking the block-byte target (test-only).
    Dr3 = jax.random.normal(k5, (4, 4, 64, 64), dtype=jnp.float32)   # 65536 elems
    Df3 = jax.random.normal(k6, (2, 3, 50, 30), dtype=jnp.float32)   # 9000 elems (ragged)
    d_loss3 = wasserstein_d_loss(Dr3, Df3, force_pallas=True, block_bytes=64 * 1024)
    jax.block_until_ready(d_loss3)
    assert jnp.allclose(d_loss3, _reference(Dr3, Df3), rtol=1e-4, atol=1e-5)

    print("KERNEL_OK")
</pallas_src>

<mosaic_0001>
module attributes {stable_mosaic.version = 11 : i64} {
  func.func @kernel(%arg0: i32, %arg1: i32, %arg2: memref<8x128xf32, #tpu.memory_space<vmem>>, %arg3: memref<8x128xf32, #tpu.memory_space<vmem>>, %arg4: memref<1x8x128xf32, #tpu.memory_space<vmem>>, %arg5: memref<1x8x128xf32, #tpu.memory_space<vmem>>) attributes {dimension_semantics = [#tpu.dimension_semantics<parallel>, #tpu.dimension_semantics<arbitrary>], iteration_bounds = array<i64: 1, 1>, scalar_prefetch = 0 : i64, scratch_operands = 0 : i64, tpu.core_type = #tpu.core_type<tc>, window_params = [{transform_indices = @transform_0, window_bounds = array<i64: 8, 128>}, {transform_indices = @transform_1, window_bounds = array<i64: 8, 128>}, {transform_indices = @transform_2, window_bounds = array<i64: 1, 8, 128>}, {transform_indices = @transform_3, window_bounds = array<i64: 1, 8, 128>}]} {
    %c1_i32 = arith.constant 1 : i32
    %0 = arith.muli %arg0, %c1_i32 : i32
    %1 = arith.addi %0, %arg1 : i32
    %c0_i32 = arith.constant 0 : i32
    %2 = arith.cmpi eq, %arg1, %c0_i32 : i32
    %3 = arith.extui %2 : i1 to i32
    %c0_i32_0 = arith.constant 0 : i32
    %4 = arith.cmpi ne, %3, %c0_i32_0 : i32
    scf.if %4 {
      %cst = arith.constant 0.000000e+00 : f32
      %21 = vector.broadcast %cst : f32 to vector<1x8x128xf32>
      %c0 = arith.constant 0 : index
      %c0_11 = arith.constant 0 : index
      %c0_12 = arith.constant 0 : index
      %22 = vector.load %arg4[%c0, %c0_11, %c0_12] : memref<1x8x128xf32, #tpu.memory_space<vmem>>, vector<1x8x128xf32>
      tpu.vector_store %arg4[%c0, %c0_11, %c0_12], %21 {strides = array<i32>} : memref<1x8x128xf32, #tpu.memory_space<vmem>>, vector<1x8x128xf32>,
      %cst_13 = arith.constant 0.000000e+00 : f32
      %23 = vector.broadcast %cst_13 : f32 to vector<1x8x128xf32>
      %c0_14 = arith.constant 0 : index
      %c0_15 = arith.constant 0 : index
      %c0_16 = arith.constant 0 : index
      %24 = vector.load %arg5[%c0_14, %c0_15, %c0_16] : memref<1x8x128xf32, #tpu.memory_space<vmem>>, vector<1x8x128xf32>
      tpu.vector_store %arg5[%c0_14, %c0_15, %c0_16], %23 {strides = array<i32>} : memref<1x8x128xf32, #tpu.memory_space<vmem>>, vector<1x8x128xf32>,
    } else {
    }
    %c1_i32_1 = arith.constant 1 : i32
    %5 = arith.cmpi slt, %1, %c1_i32_1 : i32
    %6 = arith.extui %5 : i1 to i32
    %c0_i32_2 = arith.constant 0 : i32
    %7 = arith.cmpi ne, %6, %c0_i32_2 : i32
    scf.if %7 {
      %c0 = arith.constant 0 : index
      %c0_11 = arith.constant 0 : index
      %c0_12 = arith.constant 0 : index
      %21 = vector.load %arg4[%c0, %c0_11, %c0_12] : memref<1x8x128xf32, #tpu.memory_space<vmem>>, vector<1x8x128xf32>
      %c0_13 = arith.constant 0 : index
      %c0_14 = arith.constant 0 : index
      %22 = vector.load %arg2[%c0_13, %c0_14] : memref<8x128xf32, #tpu.memory_space<vmem>>, vector<8x128xf32>
      %23 = vector.shape_cast %22 : vector<8x128xf32> to vector<1x8x128xf32>
      %cst = arith.constant dense<0.000000e+00> : vector<8x128xf32>
      %24 = vector.multi_reduction <add>, %23, %cst [0] : vector<1x8x128xf32> to vector<8x128xf32>
      %25 = vector.shape_cast %24 : vector<8x128xf32> to vector<1x8x128xf32>
      %26 = arith.addf %21, %25 : vector<1x8x128xf32>
      %c0_15 = arith.constant 0 : index
      %c0_16 = arith.constant 0 : index
      %c0_17 = arith.constant 0 : index
      %27 = vector.load %arg4[%c0_15, %c0_16, %c0_17] : memref<1x8x128xf32, #tpu.memory_space<vmem>>, vector<1x8x128xf32>
      tpu.vector_store %arg4[%c0_15, %c0_16, %c0_17], %26 {strides = array<i32>} : memref<1x8x128xf32, #tpu.memory_space<vmem>>, vector<1x8x128xf32>,
    } else {
    }
    %c1_i32_3 = arith.constant 1 : i32
    %8 = arith.cmpi sge, %1, %c1_i32_3 : i32
    %c1_i32_4 = arith.constant 1 : i32
    %9 = arith.cmpi slt, %1, %c1_i32_4 : i32
    %10 = arith.andi %8, %9 : i1
    %11 = arith.extui %10 : i1 to i32
    %c0_i32_5 = arith.constant 0 : i32
    %12 = arith.cmpi ne, %11, %c0_i32_5 : i32
    scf.if %12 {
      %c8_i32 = arith.constant 8 : i32
      %21 = arith.muli %1, %c8_i32 : i32
      %22 = tpu.iota {dimensions = array<i32: 0>} : vector<8x128xi32>
      %23 = vector.broadcast %21 : i32 to vector<8x128xi32>
      %24 = arith.addi %23, %22 : vector<8x128xi32>
      %c0 = arith.constant 0 : index
      %c0_11 = arith.constant 0 : index
      %25 = vector.load %arg2[%c0, %c0_11] : memref<8x128xf32, #tpu.memory_space<vmem>>, vector<8x128xf32>
      %c0_12 = arith.constant 0 : index
      %c0_13 = arith.constant 0 : index
      %c0_14 = arith.constant 0 : index
      %26 = vector.load %arg4[%c0_12, %c0_13, %c0_14] : memref<1x8x128xf32, #tpu.memory_space<vmem>>, vector<1x8x128xf32>
      %c8_i32_15 = arith.constant 8 : i32
      %27 = vector.broadcast %c8_i32_15 : i32 to vector<8x128xi32>
      %28 = arith.cmpi slt, %24, %27 : vector<8x128xi32>
      %cst = arith.constant 0.000000e+00 : f32
      %29 = vector.broadcast %cst : f32 to vector<8x128xf32>
      %30 = arith.select %28, %25, %29 : vector<8x128xi1>, vector<8x128xf32>
      %31 = vector.shape_cast %30 : vector<8x128xf32> to vector<1x8x128xf32>
      %cst_16 = arith.constant dense<0.000000e+00> : vector<8x128xf32>
      %32 = vector.multi_reduction <add>, %31, %cst_16 [0] : vector<1x8x128xf32> to vector<8x128xf32>
      %33 = vector.shape_cast %32 : vector<8x128xf32> to vector<1x8x128xf32>
      %34 = arith.addf %26, %33 : vector<1x8x128xf32>
      %c0_17 = arith.constant 0 : index
      %c0_18 = arith.constant 0 : index
      %c0_19 = arith.constant 0 : index
      %35 = vector.load %arg4[%c0_17, %c0_18, %c0_19] : memref<1x8x128xf32, #tpu.memory_space<vmem>>, vector<1x8x128xf32>
      tpu.vector_store %arg4[%c0_17, %c0_18, %c0_19], %34 {strides = array<i32>} : memref<1x8x128xf32, #tpu.memory_space<vmem>>, vector<1x8x128xf32>,
    } else {
    }
    %c1_i32_6 = arith.constant 1 : i32
    %13 = arith.cmpi slt, %1, %c1_i32_6 : i32
    %14 = arith.extui %13 : i1 to i32
    %c0_i32_7 = arith.constant 0 : i32
    %15 = arith.cmpi ne, %14, %c0_i32_7 : i32
    scf.if %15 {
      %c0 = arith.constant 0 : index
      %c0_11 = arith.constant 0 : index
      %c0_12 = arith.constant 0 : index
      %21 = vector.load %arg5[%c0, %c0_11, %c0_12] : memref<1x8x128xf32, #tpu.memory_space<vmem>>, vector<1x8x128xf32>
      %c0_13 = arith.constant 0 : index
      %c0_14 = arith.constant 0 : index
      %22 = vector.load %arg3[%c0_13, %c0_14] : memref<8x128xf32, #tpu.memory_space<vmem>>, vector<8x128xf32>
      %23 = vector.shape_cast %22 : vector<8x128xf32> to vector<1x8x128xf32>
      %cst = arith.constant dense<0.000000e+00> : vector<8x128xf32>
      %24 = vector.multi_reduction <add>, %23, %cst [0] : vector<1x8x128xf32> to vector<8x128xf32>
      %25 = vector.shape_cast %24 : vector<8x128xf32> to vector<1x8x128xf32>
      %26 = arith.addf %21, %25 : vector<1x8x128xf32>
      %c0_15 = arith.constant 0 : index
      %c0_16 = arith.constant 0 : index
      %c0_17 = arith.constant 0 : index
      %27 = vector.load %arg5[%c0_15, %c0_16, %c0_17] : memref<1x8x128xf32, #tpu.memory_space<vmem>>, vector<1x8x128xf32>
      tpu.vector_store %arg5[%c0_15, %c0_16, %c0_17], %26 {strides = array<i32>} : memref<1x8x128xf32, #tpu.memory_space<vmem>>, vector<1x8x128xf32>,
    } else {
    }
    %c1_i32_8 = arith.constant 1 : i32
    %16 = arith.cmpi sge, %1, %c1_i32_8 : i32
    %c1_i32_9 = arith.constant 1 : i32
    %17 = arith.cmpi slt, %1, %c1_i32_9 : i32
    %18 = arith.andi %16, %17 : i1
    %19 = arith.extui %18 : i1 to i32
    %c0_i32_10 = arith.constant 0 : i32
    %20 = arith.cmpi ne, %19, %c0_i32_10 : i32
    scf.if %20 {
      %c8_i32 = arith.constant 8 : i32
      %21 = arith.muli %1, %c8_i32 : i32
      %22 = tpu.iota {dimensions = array<i32: 0>} : vector<8x128xi32>
      %23 = vector.broadcast %21 : i32 to vector<8x128xi32>
      %24 = arith.addi %23, %22 : vector<8x128xi32>
      %c0 = arith.constant 0 : index
      %c0_11 = arith.constant 0 : index
      %25 = vector.load %arg3[%c0, %c0_11] : memref<8x128xf32, #tpu.memory_space<vmem>>, vector<8x128xf32>
      %c0_12 = arith.constant 0 : index
      %c0_13 = arith.constant 0 : index
      %c0_14 = arith.constant 0 : index
      %26 = vector.load %arg5[%c0_12, %c0_13, %c0_14] : memref<1x8x128xf32, #tpu.memory_space<vmem>>, vector<1x8x128xf32>
      %c8_i32_15 = arith.constant 8 : i32
      %27 = vector.broadcast %c8_i32_15 : i32 to vector<8x128xi32>
      %28 = arith.cmpi slt, %24, %27 : vector<8x128xi32>
      %cst = arith.constant 0.000000e+00 : f32
      %29 = vector.broadcast %cst : f32 to vector<8x128xf32>
      %30 = arith.select %28, %25, %29 : vector<8x128xi1>, vector<8x128xf32>
      %31 = vector.shape_cast %30 : vector<8x128xf32> to vector<1x8x128xf32>
      %cst_16 = arith.constant dense<0.000000e+00> : vector<8x128xf32>
      %32 = vector.multi_reduction <add>, %31, %cst_16 [0] : vector<1x8x128xf32> to vector<8x128xf32>
      %33 = vector.shape_cast %32 : vector<8x128xf32> to vector<1x8x128xf32>
      %34 = arith.addf %26, %33 : vector<1x8x128xf32>
      %c0_17 = arith.constant 0 : index
      %c0_18 = arith.constant 0 : index
      %c0_19 = arith.constant 0 : index
      %35 = vector.load %arg5[%c0_17, %c0_18, %c0_19] : memref<1x8x128xf32, #tpu.memory_space<vmem>>, vector<1x8x128xf32>
      tpu.vector_store %arg5[%c0_17, %c0_18, %c0_19], %34 {strides = array<i32>} : memref<1x8x128xf32, #tpu.memory_space<vmem>>, vector<1x8x128xf32>,
    } else {
    }
    return
  }
  func.func @transform_0(%arg0: i32, %arg1: i32) -> (i32, i32) {
    %c1_i32 = arith.constant 1 : i32
    %0 = arith.muli %arg0, %c1_i32 : i32
    %1 = arith.addi %0, %arg1 : i32
    %c0_i32 = arith.constant 0 : i32
    %2 = arith.minsi %1, %c0_i32 : i32
    %c0_i32_0 = arith.constant 0 : i32
    %c0_i32_1 = arith.constant 0 : i32
    return %2, %c0_i32_0 : i32, i32
  }
  func.func @transform_1(%arg0: i32, %arg1: i32) -> (i32, i32) {
    %c1_i32 = arith.constant 1 : i32
    %0 = arith.muli %arg0, %c1_i32 : i32
    %1 = arith.addi %0, %arg1 : i32
    %c0_i32 = arith.constant 0 : i32
    %2 = arith.minsi %1, %c0_i32 : i32
    %c0_i32_0 = arith.constant 0 : i32
    %c0_i32_1 = arith.constant 0 : i32
    return %2, %c0_i32_0 : i32, i32
  }
  func.func @transform_2(%arg0: i32, %arg1: i32) -> (i32, i32, i32) {
    %c0_i32 = arith.constant 0 : i32
    %c0_i32_0 = arith.constant 0 : i32
    %c0_i32_1 = arith.constant 0 : i32
    return %arg0, %c0_i32, %c0_i32_0 : i32, i32, i32
  }
  func.func @transform_3(%arg0: i32, %arg1: i32) -> (i32, i32, i32) {
    %c0_i32 = arith.constant 0 : i32
    %c0_i32_0 = arith.constant 0 : i32
    %c0_i32_1 = arith.constant 0 : i32
    return %arg0, %c0_i32, %c0_i32_0 : i32, i32, i32
  }
}

</mosaic_0001>

<llo_original>
// kernel: tpu_custom_call.1
$region0: #{tpu_custom_call.1}
  #allocation0 [shape = 'u32[]', space=smem, size = 0x4, offset = 0x4, fixed_abs, tag = 'smem constant byte address 0x4 - core index']
  #allocation1 [shape = 'u32[144,128]{1,0:T(1,128)}', space=vmem, size = 0x12000, scoped, tag = 'internal scratch']
  %s0 = inlined_call_operand.hbm [shape: f32[8,128], index: 0, kind: input, shape index: {}]
  %s1 = inlined_call_operand.hbm [shape: f32[8,128], index: 1, kind: input, shape index: {}]
  %s2 = inlined_call_operand.hbm [shape: f32[1,8,128], index: 2, kind: output, shape index: {0}]
  %s3 = inlined_call_operand.hbm [shape: f32[1,8,128], index: 3, kind: output, shape index: {1}]
  %4 = xla_tuple %s2, %s3
  %s5 = sld [smem:[#allocation0]]
  $region54: #{tpu_custom_call.1} parent=0
    _
  %s7 = ssub.s32 1, %s5
  %s8 = scalar_select 0, %s7, %s5
  $region1: #{tpu_custom_call.1} parent=0
    #allocation2 [shape = 'u8[4096]{0}', space=vmem, size = 0x1000, scoped, tag = 'input window, operand 0, single buffered']
    #allocation3 [shape = 's32[1]{0}', space=sflag, size = 0x4, scoped, tag = 'scoped memory for tpu_custom_call.1']
    #allocation4 [shape = 's32[1]{0}', space=sflag, size = 0x4, scoped, tag = 'scoped memory for tpu_custom_call.1']
    #allocation5 [shape = 'u8[4096]{0}', space=vmem, size = 0x1000, scoped, tag = 'input window, operand 1, single buffered']
    #allocation6 [shape = 's32[1]{0}', space=sflag, size = 0x4, scoped, tag = 'scoped memory for tpu_custom_call.1']
    #allocation7 [shape = 'u8[4096]{0}', space=vmem, size = 0x1000, scoped, tag = 'output window, operand 0, single buffered']
    #allocation8 [shape = 'u8[4096]{0}', space=vmem, size = 0x1000, scoped, tag = 'output window, operand 1, single buffered']
    #allocation9 [shape = 's32[1]{0}', space=sflag, size = 0x4, scoped, tag = 'scoped memory for tpu_custom_call.1']
    %9 = vsyncpa [#allocation3], 0
    %10 = vsyncpa [#allocation6], 0
    %11 = vsyncpa [#allocation4], 0
    %12 = vsyncpa [#allocation9], 0
    // Predicated region
    $region2: #{tpu_custom_call.1} parent=1 // pred_check
      _
    $region3: #{tpu_custom_call.1} parent=1 // pred_check_branch
      %14 = sbr.rel (0) target = $region5
    $region4: #{tpu_custom_call.1} parent=1 // pred_region
      %s15 = sadd.s32 0, 0
      %p16 = scmp.lt.s32.totalorder %s15, 0
      %s17 = scalar_select %p16, %s15, 0
      %s19 = ssub.s32 128, 128
      %20 = vsyncadd [#allocation3], %s19
      %s21 = smul.addr %s17, 128
      %s22 = scalar_lea.hbm %s0, %s21
      %s24 = sshll.u32 [#allocation2], 4
      %s25 = int_to_ptr.vmem [resolvable:$true] %s24
      %27 = dma.hbm_to_vmem [thread:$0]  %s22, 128, %s25, [#allocation3]
    $region5: #{tpu_custom_call.1} parent=1 // pred_fallthru
      _
    // Predicated region
    $region6: #{tpu_custom_call.1} parent=1 // pred_check
      _
    $region7: #{tpu_custom_call.1} parent=1 // pred_check_branch
      %29 = sbr.rel (0) target = $region9
    $region8: #{tpu_custom_call.1} parent=1 // pred_region
      %s30 = sadd.s32 0, 0
      %p31 = scmp.lt.s32.totalorder %s30, 0
      %s32 = scalar_select %p31, %s30, 0
      %s34 = ssub.s32 128, 128
      %35 = vsyncadd [#allocation6], %s34
      %s36 = smul.addr %s32, 128
      %s37 = scalar_lea.hbm %s1, %s36
      %s39 = sshll.u32 [#allocation5], 4
      %s40 = int_to_ptr.vmem [resolvable:$true] %s39
      %42 = dma.hbm_to_vmem [thread:$0]  %s37, 128, %s40, [#allocation6]
    $region9: #{tpu_custom_call.1} parent=1 // pred_fallthru
      _
    // Predicated region
    $region10: #{tpu_custom_call.1} parent=1 // pred_check
      _
    $region11: #{tpu_custom_call.1} parent=1 // pred_check_branch
      %44 = sbr.rel (0) target = $region13
    $region12: #{tpu_custom_call.1} parent=1 // pred_region
      %45 = dma.done [#allocation3], 128
    $region13: #{tpu_custom_call.1} parent=1 // pred_fallthru
      _
    // Predicated region
    $region14: #{tpu_custom_call.1} parent=1 // pred_check
      _
    $region15: #{tpu_custom_call.1} parent=1 // pred_check_branch
      %47 = sbr.rel (0) target = $region17
    $region16: #{tpu_custom_call.1} parent=1 // pred_region
      %48 = dma.done [#allocation6], 128
    $region17: #{tpu_custom_call.1} parent=1 // pred_fallthru
      _
    %s49 = sadd.s32 0, 0
    %p50 = scmp.lt.s32.totalorder %s49, 0
    %s51 = scalar_select %p50, %s49, 0
    %s52 = sadd.s32 0, 0
    %p53 = scmp.lt.s32.totalorder %s52, 0
    %s54 = scalar_select %p53, %s52, 0
    %s55 = sadd.s32 0, 0
    %p56 = scmp.eq.s32.totalorder 0, 0
    // Predicated region
    $region18: #{tpu_custom_call.1} parent=1 // pred_check
      %p57 = pneg %p56
    $region19: #{tpu_custom_call.1} parent=1 // pred_check_branch
      %59 = sbr.rel (%p57) target = $region21
    $region20: #{tpu_custom_call.1} parent=1 // pred_region
      %60 = vst [vmem:[#allocation7] sm:$0xff] 0.0
      %61 = vst [vmem:[#allocation8] sm:$0xff] 0.0
    $region21: #{tpu_custom_call.1} parent=1 // pred_fallthru
      _
    %p62 = scmp.lt.s32.totalorder %s55, 1
    // Predicated region
    $region22: #{tpu_custom_call.1} parent=1 // pred_check
      %p63 = pneg %p62
    $region23: #{tpu_custom_call.1} parent=1 // pred_check_branch
      %65 = sbr.rel (%p63) target = $region25
    $region24: #{tpu_custom_call.1} parent=1 // pred_region
      %v66 = vld [vmem:[#allocation7] sm:$0xff]
      %v67 = vld [vmem:[#allocation2] sm:$0xff]
      %v68 = vadd.f32 %v67, 0.0
      %v69 = vadd.f32 %v66, %v68
      %70 = vst [vmem:[#allocation7] sm:$0xff] %v69
    $region25: #{tpu_custom_call.1} parent=1 // pred_fallthru
      _
    %p71 = scmp.ge.s32.totalorder %s55, 1
    %p72 = pnand %p71, %p62
    %p73 = pneg %p72
    // Predicated region
    $region26: #{tpu_custom_call.1} parent=1 // pred_check
      _
    $region27: #{tpu_custom_call.1} parent=1 // pred_check_branch
      %75 = sbr.rel (%p72) target = $region29
    $region28: #{tpu_custom_call.1} parent=1 // pred_region
      %s76 = smul.u32 %s55, 8
      %v77 = vlaneseq
      %v78 = vshrl.u32 %v77, 7
      %v79 = vstv %s76
      %v80 = vadd.s32 %v79, %v78
      %v81 = vld [vmem:[#allocation2] sm:$0xff]
      %v82 = vld [vmem:[#allocation7] sm:$0xff]
      %vm83 = vcmp.lt.s32.totalorder %v80, 8
      %v84 = vsel %vm83, %v81, 0.0
      %v85 = vadd.f32 %v84, 0.0
      %v86 = vadd.f32 %v82, %v85
      %87 = vst [vmem:[#allocation7] sm:$0xff] %v86
    $region29: #{tpu_custom_call.1} parent=1 // pred_fallthru
      _
    // Predicated region
    $region30: #{tpu_custom_call.1} parent=1 // pred_check
      %p88 = pneg %p62
    $region31: #{tpu_custom_call.1} parent=1 // pred_check_branch
      %90 = sbr.rel (%p88) target = $region33
    $region32: #{tpu_custom_call.1} parent=1 // pred_region
      %v91 = vld [vmem:[#allocation8] sm:$0xff]
      %v92 = vld [vmem:[#allocation5] sm:$0xff]
      %v93 = vadd.f32 %v92, 0.0
      %v94 = vadd.f32 %v91, %v93
      %95 = vst [vmem:[#allocation8] sm:$0xff] %v94
    $region33: #{tpu_custom_call.1} parent=1 // pred_fallthru
      _
    // Predicated region
    $region34: #{tpu_custom_call.1} parent=1 // pred_check
      _
    $region35: #{tpu_custom_call.1} parent=1 // pred_check_branch
      %97 = sbr.rel (%p72) target = $region37
    $region36: #{tpu_custom_call.1} parent=1 // pred_region
      %s98 = smul.u32 %s55, 8
      %v99 = vlaneseq
      %v100 = vshrl.u32 %v99, 7
      %v101 = vstv %s98
      %v102 = vadd.s32 %v101, %v100
      %v103 = vld [vmem:[#allocation5] sm:$0xff]
      %v104 = vld [vmem:[#allocation8] sm:$0xff]
      %vm105 = vcmp.lt.s32.totalorder %v102, 8
      %v106 = vsel %vm105, %v103, 0.0
      %v107 = vadd.f32 %v106, 0.0
      %v108 = vadd.f32 %v104, %v107
      %109 = vst [vmem:[#allocation8] sm:$0xff] %v108
    $region37: #{tpu_custom_call.1} parent=1 // pred_fallthru
      _
    // Predicated region
    $region38: #{tpu_custom_call.1} parent=1 // pred_check
      _
    $region39: #{tpu_custom_call.1} parent=1 // pred_check_branch
      %111 = sbr.rel (0) target = $region41
    $region40: #{tpu_custom_call.1} parent=1 // pred_region
      %s113 = ssub.s32 128, 128
      %114 = vsyncadd [#allocation4], %s113
      %s116 = sshll.u32 [#allocation7], 4
      %s117 = int_to_ptr.vmem [resolvable:$true] %s116
      %119 = dma.vmem_to_hbm [thread:$0]  %s117, 128, %s2, [#allocation4]
    $region41: #{tpu_custom_call.1} parent=1 // pred_fallthru
      _
    // Predicated region
    $region42: #{tpu_custom_call.1} parent=1 // pred_check
      _
    $region43: #{tpu_custom_call.1} parent=1 // pred_check_branch
      %121 = sbr.rel (0) target = $region45
    $region44: #{tpu_custom_call.1} parent=1 // pred_region
      %s123 = ssub.s32 128, 128
      %124 = vsyncadd [#allocation9], %s123
      %s126 = sshll.u32 [#allocation8], 4
      %s127 = int_to_ptr.vmem [resolvable:$true] %s126
      %129 = dma.vmem_to_hbm [thread:$0]  %s127, 128, %s3, [#allocation9]
    $region45: #{tpu_custom_call.1} parent=1 // pred_fallthru
      _
    // Predicated region
    $region46: #{tpu_custom_call.1} parent=1 // pred_check
      _
    $region47: #{tpu_custom_call.1} parent=1 // pred_check_branch
      %131 = sbr.rel (0) target = $region49
    $region48: #{tpu_custom_call.1} parent=1 // pred_region
      %132 = dma.done [#allocation4], 128
    $region49: #{tpu_custom_call.1} parent=1 // pred_fallthru
      _
    // Predicated region
    $region50: #{tpu_custom_call.1} parent=1 // pred_check
      _
    $region51: #{tpu_custom_call.1} parent=1 // pred_check_branch
      %134 = sbr.rel (0) target = $region53
    $region52: #{tpu_custom_call.1} parent=1 // pred_region
      %135 = dma.done [#allocation9], 128
    $region53: #{tpu_custom_call.1} parent=1 // pred_fallthru
      _
    %136 = vsyncpa [#allocation3], 1
    %137 = vsyncpa [#allocation6], 1
    %138 = vsyncpa [#allocation4], 1
    %139 = vsyncpa [#allocation9], 1

</llo_original>
